<compile_context>
chip_gen: v6e
topology: v6e:2x2x1
jax: 0.10.0
libtpu: 0.0.40
codegen_flags: <defaults>
</compile_context>

<pallas_src>
import functools

import jax
import jax.numpy as jnp
from jax import lax
from jax.experimental import pallas as pl
from jax.experimental.pallas import tpu as pltpu


def _as_i32(v):
    """Reinterpret an unsigned 32-bit Python int as a signed int32 constant."""
    v &= 0xFFFFFFFF
    return v - (1 << 32) if v >= (1 << 31) else v


_MIX_C1 = _as_i32(0x7FEB352D)
_MIX_C2 = _as_i32(0x846CA68B)
_SEED_C = _as_i32(0x9E3779B9)


def _mix32(x):
    """Murmur/splitmix-style 32-bit finalizer on int32 lanes (wrapping arithmetic)."""
    x = x ^ lax.shift_right_logical(x, 16)
    x = x * jnp.int32(_MIX_C1)
    x = x ^ lax.shift_right_logical(x, 15)
    x = x * jnp.int32(_MIX_C2)
    x = x ^ lax.shift_right_logical(x, 16)
    return x


def _dropout_matmul_kernel(seed_ref, a_ref, b_ref, o_ref, *, p, G, S):
    """G (batch*head) slices per step: o[g] = dropout(a[g], p) @ b[g]."""
    i = pl.program_id(0)

    a = a_ref[...]  # (G, S, S) f32
    b = b_ref[...]  # (G, S, D) f32

    if p > 0.0:
        seed = seed_ref[0]
        # Absolute linear index of every element of this (G, S, S) block.
        g_idx = lax.broadcasted_iota(jnp.int32, a.shape, 0)
        q_idx = lax.broadcasted_iota(jnp.int32, a.shape, 1)
        k_idx = lax.broadcasted_iota(jnp.int32, a.shape, 2)
        lin = ((i * G + g_idx) * S + q_idx) * S + k_idx
        # Stateless counter-based hash -> uniform in [0, 1) with 24-bit resolution.
        h = _mix32(lin ^ (seed * jnp.int32(_SEED_C)))
        u = jnp.bitwise_and(h, jnp.int32(0x00FFFFFF)).astype(jnp.float32)
        u = u * jnp.float32(1.0 / 16777216.0)
        # Keep with prob (1-p); fold the 1/(1-p) scale into the select constant.
        keep_scaled = jnp.where(
            u >= jnp.float32(p),
            jnp.float32(1.0 / (1.0 - p)),
            jnp.float32(0.0),
        )
        a = a * keep_scaled
    # else: eval-mode dropout is identity.

    o_ref[...] = jnp.einsum(
        "gqk,gkd->gqd", a, b, preferred_element_type=jnp.float32
    ).astype(o_ref.dtype)


def dropout_matmul(x346, x335, *, p=0.1, seed=0):
    """dropout(x346, p) @ x335, matching torch.matmul over the (B, H) batch axes."""
    assert 0.0 <= p < 1.0, "dropout prob must be in [0, 1)"
    B, H, S, S2 = x346.shape
    Bv, Hv, Sv, D = x335.shape
    assert (B, H, S) == (Bv, Hv, Sv) and S2 == Sv

    BH = B * H
    # Group G slices per grid step (largest divisor of B*H that is <= 4).
    G = 1
    for cand in (4, 3, 2, 1):
        if BH % cand == 0:
            G = cand
            break

    a = x346.reshape(BH, S, S)
    b = x335.reshape(BH, S, D)
    seed_arr = jnp.array([seed], dtype=jnp.int32)

    kernel = functools.partial(_dropout_matmul_kernel, p=float(p), G=G, S=S)

    bytes_accessed = 4 * (BH * S * S + 2 * BH * S * D)
    cost = pl.CostEstimate(
        flops=2 * BH * S * S * D,
        transcendentals=0,
        bytes_accessed=bytes_accessed,
    )

    out = pl.pallas_call(
        kernel,
        out_shape=jax.ShapeDtypeStruct((BH, S, D), x346.dtype),
        grid_spec=pltpu.PrefetchScalarGridSpec(
            num_scalar_prefetch=1,
            grid=(BH // G,),
            in_specs=[
                pl.BlockSpec((G, S, S), lambda i, seed_ref: (i, 0, 0)),
                pl.BlockSpec((G, S, D), lambda i, seed_ref: (i, 0, 0)),
            ],
            out_specs=pl.BlockSpec((G, S, D), lambda i, seed_ref: (i, 0, 0)),
        ),
        compiler_params=pltpu.CompilerParams(
            # Mask depends only on absolute element indices -> order independent,
            # so the grid axis can be sharded across TensorCores (v7x megacore).
            dimension_semantics=("parallel",),
        ),
        cost_estimate=cost,
    )(seed_arr, a, b)

    return out.reshape(B, H, S, D)


if __name__ == "__main__":
    # Small shapes consistent with the module's [1, 12, 384, 384] x [1, 12, 384, 64]:
    B, H, S, D = 1, 2, 128, 64

    key = jax.random.PRNGKey(0)
    k1, k2 = jax.random.split(key)
    x346 = jax.random.normal(k1, (B, H, S, S), dtype=jnp.float32)  # attn probs analogue
    x335 = jax.random.normal(k2, (B, H, S, D), dtype=jnp.float32)  # values analogue

    # Training-mode forward (dropout p=0.1, deterministic in-kernel mask).
    out = dropout_matmul(x346, x335, p=0.1, seed=0)
    out = jax.block_until_ready(out)
    assert out.shape == (B, H, S, D) and out.dtype == jnp.float32
    assert bool(jnp.all(jnp.isfinite(out)))

    # Sanity check: with p=0.0 (eval-mode dropout == identity) the kernel must
    # reproduce a plain batched matmul (up to f32 matmul tolerance).
    out_eval = jax.block_until_ready(dropout_matmul(x346, x335, p=0.0))
    ref = jnp.einsum("bhqk,bhkd->bhqd", x346, x335)
    assert jnp.allclose(out_eval, ref, atol=1e-4, rtol=1e-4)

    print("KERNEL_OK")
</pallas_src>

<mosaic_0001>
module attributes {stable_mosaic.version = 11 : i64} {
  func.func @_dropout_matmul_kernel(%arg0: i32, %arg1: memref<1xi32, #tpu.memory_space<smem>>, %arg2: memref<2x128x128xf32, #tpu.memory_space<vmem>>, %arg3: memref<2x128x64xf32, #tpu.memory_space<vmem>>, %arg4: memref<2x128x64xf32, #tpu.memory_space<vmem>>) attributes {dimension_semantics = [#tpu.dimension_semantics<parallel>], iteration_bounds = array<i64: 1>, scalar_prefetch = 1 : i64, scratch_operands = 0 : i64, tpu.core_type = #tpu.core_type<tc>, window_params = [{transform_indices = @transform_0, window_bounds = array<i64: 2, 128, 128>}, {transform_indices = @transform_1, window_bounds = array<i64: 2, 128, 64>}, {transform_indices = @transform_2, window_bounds = array<i64: 2, 128, 64>}]} {
    %c0 = arith.constant 0 : index
    %c0_0 = arith.constant 0 : index
    %c0_1 = arith.constant 0 : index
    %0 = vector.load %arg2[%c0, %c0_0, %c0_1] : memref<2x128x128xf32, #tpu.memory_space<vmem>>, vector<2x128x128xf32>
    %c0_2 = arith.constant 0 : index
    %c0_3 = arith.constant 0 : index
    %c0_4 = arith.constant 0 : index
    %1 = vector.load %arg3[%c0_2, %c0_3, %c0_4] : memref<2x128x64xf32, #tpu.memory_space<vmem>>, vector<2x128x64xf32>
    %c0_5 = arith.constant 0 : index
    %2 = memref.load %arg1[%c0_5] : memref<1xi32, #tpu.memory_space<smem>>
    %3 = tpu.iota {dimensions = array<i32: 0>} : vector<2x128x128xi32>
    %4 = tpu.iota {dimensions = array<i32: 1>} : vector<2x128x128xi32>
    %5 = tpu.iota {dimensions = array<i32: 2>} : vector<2x128x128xi32>
    %c2_i32 = arith.constant 2 : i32
    %6 = arith.muli %arg0, %c2_i32 : i32
    %7 = vector.broadcast %6 : i32 to vector<2x128x128xi32>
    %8 = arith.addi %7, %3 : vector<2x128x128xi32>
    %c128_i32 = arith.constant 128 : i32
    %9 = vector.broadcast %c128_i32 : i32 to vector<2x128x128xi32>
    %10 = arith.muli %8, %9 : vector<2x128x128xi32>
    %11 = arith.addi %10, %4 : vector<2x128x128xi32>
    %c128_i32_6 = arith.constant 128 : i32
    %12 = vector.broadcast %c128_i32_6 : i32 to vector<2x128x128xi32>
    %13 = arith.muli %11, %12 : vector<2x128x128xi32>
    %14 = arith.addi %13, %5 : vector<2x128x128xi32>
    %c-1640531527_i32 = arith.constant -1640531527 : i32
    %15 = arith.muli %2, %c-1640531527_i32 : i32
    %16 = vector.broadcast %15 : i32 to vector<2x128x128xi32>
    %17 = arith.xori %14, %16 : vector<2x128x128xi32>
    %c16_i32 = arith.constant 16 : i32
    %18 = vector.broadcast %c16_i32 : i32 to vector<2x128x128xi32>
    %19 = arith.shrui %17, %18 : vector<2x128x128xi32>
    %20 = arith.xori %17, %19 : vector<2x128x128xi32>
    %c2146121005_i32 = arith.constant 2146121005 : i32
    %21 = vector.broadcast %c2146121005_i32 : i32 to vector<2x128x128xi32>
    %22 = arith.muli %20, %21 : vector<2x128x128xi32>
    %c15_i32 = arith.constant 15 : i32
    %23 = vector.broadcast %c15_i32 : i32 to vector<2x128x128xi32>
    %24 = arith.shrui %22, %23 : vector<2x128x128xi32>
    %25 = arith.xori %22, %24 : vector<2x128x128xi32>
    %c-2073254261_i32 = arith.constant -2073254261 : i32
    %26 = vector.broadcast %c-2073254261_i32 : i32 to vector<2x128x128xi32>
    %27 = arith.muli %25, %26 : vector<2x128x128xi32>
    %c16_i32_7 = arith.constant 16 : i32
    %28 = vector.broadcast %c16_i32_7 : i32 to vector<2x128x128xi32>
    %29 = arith.shrui %27, %28 : vector<2x128x128xi32>
    %30 = arith.xori %27, %29 : vector<2x128x128xi32>
    %c16777215_i32 = arith.constant 16777215 : i32
    %31 = vector.broadcast %c16777215_i32 : i32 to vector<2x128x128xi32>
    %32 = arith.andi %30, %31 : vector<2x128x128xi32>
    %33 = arith.sitofp %32 : vector<2x128x128xi32> to vector<2x128x128xf32>
    %cst = arith.constant 5.96046448E-8 : f32
    %34 = vector.broadcast %cst : f32 to vector<2x128x128xf32>
    %35 = arith.mulf %33, %34 : vector<2x128x128xf32>
    %cst_8 = arith.constant 1.000000e-01 : f32
    %36 = vector.broadcast %cst_8 : f32 to vector<2x128x128xf32>
    %37 = arith.cmpf oge, %35, %36 : vector<2x128x128xf32>
    %cst_9 = arith.constant 1.11111116 : f32
    %cst_10 = arith.constant 0.000000e+00 : f32
    %38 = vector.broadcast %cst_9 : f32 to vector<2x128x128xf32>
    %39 = vector.broadcast %cst_10 : f32 to vector<2x128x128xf32>
    %40 = arith.select %37, %38, %39 : vector<2x128x128xi1>, vector<2x128x128xf32>
    %41 = arith.mulf %0, %40 : vector<2x128x128xf32>
    "tpu.trace_start"() <{level = 10 : i32, message = "gqk,gkd->gqd"}> : () -> ()
    %cst_11 = arith.constant dense<0.000000e+00> : vector<2x128x64xf32>
    %42 = tpu.matmul %41, %1, %cst_11 {dimension_numbers = #tpu.dot_dimension_numbers<[2], [1], [1], [2], [0, 0, 0, 1, 1, 2], [0], [0]>} : vector<2x128x128xf32>, vector<2x128x64xf32>, vector<2x128x64xf32> -> vector<2x128x64xf32>
    "tpu.trace_stop"() : () -> ()
    %c0_12 = arith.constant 0 : index
    %c0_13 = arith.constant 0 : index
    %c0_14 = arith.constant 0 : index
    %43 = vector.load %arg4[%c0_12, %c0_13, %c0_14] : memref<2x128x64xf32, #tpu.memory_space<vmem>>, vector<2x128x64xf32>
    tpu.vector_store %arg4[%c0_12, %c0_13, %c0_14], %42 {strides = array<i32>} : memref<2x128x64xf32, #tpu.memory_space<vmem>>, vector<2x128x64xf32>,
    return
  }
  func.func @transform_0(%arg0: i32, %arg1: memref<1xi32, #tpu.memory_space<smem>>) -> (i32, i32, i32) {
    %c0_i32 = arith.constant 0 : i32
    %c0_i32_0 = arith.constant 0 : i32
    %c0_i32_1 = arith.constant 0 : i32
    return %arg0, %c0_i32, %c0_i32_0 : i32, i32, i32
  }
  func.func @transform_1(%arg0: i32, %arg1: memref<1xi32, #tpu.memory_space<smem>>) -> (i32, i32, i32) {
    %c0_i32 = arith.constant 0 : i32
    %c0_i32_0 = arith.constant 0 : i32
    %c0_i32_1 = arith.constant 0 : i32
    return %arg0, %c0_i32, %c0_i32_0 : i32, i32, i32
  }
  func.func @transform_2(%arg0: i32, %arg1: memref<1xi32, #tpu.memory_space<smem>>) -> (i32, i32, i32) {
    %c0_i32 = arith.constant 0 : i32
    %c0_i32_0 = arith.constant 0 : i32
    %c0_i32_1 = arith.constant 0 : i32
    return %arg0, %c0_i32, %c0_i32_0 : i32, i32, i32
  }
}

</mosaic_0001>

<llo_original>
// kernel: tpu_custom_call.1
$region0: #{tpu_custom_call.1}
  #allocation0 [shape = 'u32[]', space=smem, size = 0x4, offset = 0x4, fixed_abs, tag = 'smem constant byte address 0x4 - core index']
  #allocation1 [shape = 'u32[144,128]{1,0:T(1,128)}', space=vmem, size = 0x12000, scoped, tag = 'internal scratch']
  #allocation2 [shape = 's32[1]{0}', space=sflag, size = 0x4, scoped, tag = 'scoped memory for tpu_custom_call.1']
  #allocation3 [shape = 's32[1]{0:T(128)S(6)}', space=smem, size = 0x200, scoped, tag = 'prefetched SMEM operand 0']
  %s0 = inlined_call_operand.<no memory space> [shape: s32[1], index: 0, kind: input, shape index: {}]
  %s1 = inlined_call_operand.vmem [shape: f32[2,128,128], index: 1, kind: input, shape index: {}]
  %s2 = inlined_call_operand.vmem [shape: f32[2,128,64], index: 2, kind: input, shape index: {}]
  %s3 = inlined_call_operand.vmem [shape: f32[2,128,64], index: 3, kind: output, shape index: {}]
  %s4 = sld [smem:[#allocation0]]
  $region18: #{tpu_custom_call.1} parent=0
    _
  %s6 = ssub.s32 1, %s4
  %s7 = scalar_select 0, %s6, %s4
  %8 = sst [smem:[#allocation3]] %s0
  // Predicated region
  $region2: #{tpu_custom_call.1} parent=0 // pred_check
    _
  $region3: #{tpu_custom_call.1} parent=0 // pred_check_branch
    %10 = sbr.rel (0) target = $region5
  $region4: #{tpu_custom_call.1} parent=0 // pred_region
    _
  $region5: #{tpu_custom_call.1} parent=0 // pred_fallthru
    _
  // Predicated region
  $region6: #{tpu_custom_call.1} parent=0 // pred_check
    _
  $region7: #{tpu_custom_call.1} parent=0 // pred_check_branch
    %12 = sbr.rel (0) target = $region9
  $region8: #{tpu_custom_call.1} parent=0 // pred_region
    _
  $region9: #{tpu_custom_call.1} parent=0 // pred_fallthru
    _
  %v13 = vld [vmem:[%s1] sm:$0xff]
  %v14 = vld [vmem:[%s1 + $0x8] sm:$0xff]
  %v15 = vld [vmem:[%s1 + $0x10] sm:$0xff]
  %v16 = vld [vmem:[%s1 + $0x18] sm:$0xff]
  %v17 = vld [vmem:[%s1 + $0x20] sm:$0xff]
  %v18 = vld [vmem:[%s1 + $0x28] sm:$0xff]
  %v19 = vld [vmem:[%s1 + $0x30] sm:$0xff]
  %v20 = vld [vmem:[%s1 + $0x38] sm:$0xff]
  %v21 = vld [vmem:[%s1 + $0x40] sm:$0xff]
  %v22 = vld [vmem:[%s1 + $0x48] sm:$0xff]
  %v23 = vld [vmem:[%s1 + $0x50] sm:$0xff]
  %v24 = vld [vmem:[%s1 + $0x58] sm:$0xff]
  %v25 = vld [vmem:[%s1 + $0x60] sm:$0xff]
  %v26 = vld [vmem:[%s1 + $0x68] sm:$0xff]
  %v27 = vld [vmem:[%s1 + $0x70] sm:$0xff]
  %v28 = vld [vmem:[%s1 + $0x78] sm:$0xff]
  %v29 = vld [vmem:[%s1 + $0x80] sm:$0xff]
  %v30 = vld [vmem:[%s1 + $0x88] sm:$0xff]
  %v31 = vld [vmem:[%s1 + $0x90] sm:$0xff]
  %v32 = vld [vmem:[%s1 + $0x98] sm:$0xff]
  %v33 = vld [vmem:[%s1 + $0xa0] sm:$0xff]
  %v34 = vld [vmem:[%s1 + $0xa8] sm:$0xff]
  %v35 = vld [vmem:[%s1 + $0xb0] sm:$0xff]
  %v36 = vld [vmem:[%s1 + $0xb8] sm:$0xff]
  %v37 = vld [vmem:[%s1 + $0xc0] sm:$0xff]
  %v38 = vld [vmem:[%s1 + $0xc8] sm:$0xff]
  %v39 = vld [vmem:[%s1 + $0xd0] sm:$0xff]
  %v40 = vld [vmem:[%s1 + $0xd8] sm:$0xff]
  %v41 = vld [vmem:[%s1 + $0xe0] sm:$0xff]
  %v42 = vld [vmem:[%s1 + $0xe8] sm:$0xff]
  %v43 = vld [vmem:[%s1 + $0xf0] sm:$0xff]
  %v44 = vld [vmem:[%s1 + $0xf8] sm:$0xff]
  %v45 = vld [vmem:[%s2] sm:$0xff]
  %v46 = vld [vmem:[%s2 + $0x8] sm:$0xff]
  %v47 = vld [vmem:[%s2 + $0x10] sm:$0xff]
  %v48 = vld [vmem:[%s2 + $0x18] sm:$0xff]
  %v49 = vld [vmem:[%s2 + $0x20] sm:$0xff]
  %v50 = vld [vmem:[%s2 + $0x28] sm:$0xff]
  %v51 = vld [vmem:[%s2 + $0x30] sm:$0xff]
  %v52 = vld [vmem:[%s2 + $0x38] sm:$0xff]
  %v53 = vld [vmem:[%s2 + $0x40] sm:$0xff]
  %v54 = vld [vmem:[%s2 + $0x48] sm:$0xff]
  %v55 = vld [vmem:[%s2 + $0x50] sm:$0xff]
  %v56 = vld [vmem:[%s2 + $0x58] sm:$0xff]
  %v57 = vld [vmem:[%s2 + $0x60] sm:$0xff]
  %v58 = vld [vmem:[%s2 + $0x68] sm:$0xff]
  %v59 = vld [vmem:[%s2 + $0x70] sm:$0xff]
  %v60 = vld [vmem:[%s2 + $0x78] sm:$0xff]
  %v61 = vld [vmem:[%s2 + $0x80] sm:$0xff]
  %v62 = vld [vmem:[%s2 + $0x88] sm:$0xff]
  %v63 = vld [vmem:[%s2 + $0x90] sm:$0xff]
  %v64 = vld [vmem:[%s2 + $0x98] sm:$0xff]
  %v65 = vld [vmem:[%s2 + $0xa0] sm:$0xff]
  %v66 = vld [vmem:[%s2 + $0xa8] sm:$0xff]
  %v67 = vld [vmem:[%s2 + $0xb0] sm:$0xff]
  %v68 = vld [vmem:[%s2 + $0xb8] sm:$0xff]
  %v69 = vld [vmem:[%s2 + $0xc0] sm:$0xff]
  %v70 = vld [vmem:[%s2 + $0xc8] sm:$0xff]
  %v71 = vld [vmem:[%s2 + $0xd0] sm:$0xff]
  %v72 = vld [vmem:[%s2 + $0xd8] sm:$0xff]
  %v73 = vld [vmem:[%s2 + $0xe0] sm:$0xff]
  %v74 = vld [vmem:[%s2 + $0xe8] sm:$0xff]
  %v75 = vld [vmem:[%s2 + $0xf0] sm:$0xff]
  %v76 = vld [vmem:[%s2 + $0xf8] sm:$0xff]
  %s77 = sld [smem:[#allocation3]]
  %v78 = vlaneseq
  %v79 = vshrl.u32 %v78, 7
  %v80 = vadd.s32 %v79, 8
  %v81 = vadd.s32 %v79, 16
  %v82 = vadd.s32 %v79, 24
  %v83 = vadd.s32 %v79, 32
  %v84 = vadd.s32 %v79, 40
  %v85 = vadd.s32 %v79, 48
  %v86 = vadd.s32 %v79, 56
  %v87 = vadd.s32 %v79, 64
  %v88 = vadd.s32 %v79, 72
  %v89 = vadd.s32 %v79, 80
  %v90 = vadd.s32 %v79, 88
  %v91 = vadd.s32 %v79, 96
  %v92 = vadd.s32 %v79, 104
  %v93 = vadd.s32 %v79, 112
  %v94 = vadd.s32 %v79, 120
  %v95 = vlaneseq
  %v96 = vand.u32 %v95, 127
  %s97 = smul.u32 0, 2
  %v98 = vstv %s97
  %v99 = vadd.s32 %v98, 1
  %v100 = vmul.u32 %v98, 128
  %v101 = vmul.u32 %v99, 128
  %v102 = vadd.s32 %v100, %v79
  %v103 = vadd.s32 %v100, %v80
  %v104 = vadd.s32 %v100, %v81
  %v105 = vadd.s32 %v100, %v82
  %v106 = vadd.s32 %v100, %v83
  %v107 = vadd.s32 %v100, %v84
  %v108 = vadd.s32 %v100, %v85
  %v109 = vadd.s32 %v100, %v86
  %v110 = vadd.s32 %v100, %v87
  %v111 = vadd.s32 %v100, %v88
  %v112 = vadd.s32 %v100, %v89
  %v113 = vadd.s32 %v100, %v90
  %v114 = vadd.s32 %v100, %v91
  %v115 = vadd.s32 %v100, %v92
  %v116 = vadd.s32 %v100, %v93
  %v117 = vadd.s32 %v100, %v94
  %v118 = vadd.s32 %v101, %v79
  %v119 = vadd.s32 %v101, %v80
  %v120 = vadd.s32 %v101, %v81
  %v121 = vadd.s32 %v101, %v82
  %v122 = vadd.s32 %v101, %v83
  %v123 = vadd.s32 %v101, %v84
  %v124 = vadd.s32 %v101, %v85
  %v125 = vadd.s32 %v101, %v86
  %v126 = vadd.s32 %v101, %v87
  %v127 = vadd.s32 %v101, %v88
  %v128 = vadd.s32 %v101, %v89
  %v129 = vadd.s32 %v101, %v90
  %v130 = vadd.s32 %v101, %v91
  %v131 = vadd.s32 %v101, %v92
  %v132 = vadd.s32 %v101, %v93
  %v133 = vadd.s32 %v101, %v94
  %v134 = vmul.u32 %v102, 128
  %v135 = vmul.u32 %v103, 128
  %v136 = vmul.u32 %v104, 128
  %v137 = vmul.u32 %v105, 128
  %v138 = vmul.u32 %v106, 128
  %v139 = vmul.u32 %v107, 128
  %v140 = vmul.u32 %v108, 128
  %v141 = vmul.u32 %v109, 128
  %v142 = vmul.u32 %v110, 128
  %v143 = vmul.u32 %v111, 128
  %v144 = vmul.u32 %v112, 128
  %v145 = vmul.u32 %v113, 128
  %v146 = vmul.u32 %v114, 128
  %v147 = vmul.u32 %v115, 128
  %v148 = vmul.u32 %v116, 128
  %v149 = vmul.u32 %v117, 128
  %v150 = vmul.u32 %v118, 128
  %v151 = vmul.u32 %v119, 128
  %v152 = vmul.u32 %v120, 128
  %v153 = vmul.u32 %v121, 128
  %v154 = vmul.u32 %v122, 128
  %v155 = vmul.u32 %v123, 128
  %v156 = vmul.u32 %v124, 128
  %v157 = vmul.u32 %v125, 128
  %v158 = vmul.u32 %v126, 128
  %v159 = vmul.u32 %v127, 128
  %v160 = vmul.u32 %v128, 128
  %v161 = vmul.u32 %v129, 128
  %v162 = vmul.u32 %v130, 128
  %v163 = vmul.u32 %v131, 128
  %v164 = vmul.u32 %v132, 128
  %v165 = vmul.u32 %v133, 128
  %v166 = vadd.s32 %v134, %v96
  %v167 = vadd.s32 %v135, %v96
  %v168 = vadd.s32 %v136, %v96
  %v169 = vadd.s32 %v137, %v96
  %v170 = vadd.s32 %v138, %v96
  %v171 = vadd.s32 %v139, %v96
  %v172 = vadd.s32 %v140, %v96
  %v173 = vadd.s32 %v141, %v96
  %v174 = vadd.s32 %v142, %v96
  %v175 = vadd.s32 %v143, %v96
  %v176 = vadd.s32 %v144, %v96
  %v177 = vadd.s32 %v145, %v96
  %v178 = vadd.s32 %v146, %v96
  %v179 = vadd.s32 %v147, %v96
  %v180 = vadd.s32 %v148, %v96
  %v181 = vadd.s32 %v149, %v96
  %v182 = vadd.s32 %v150, %v96
  %v183 = vadd.s32 %v151, %v96
  %v184 = vadd.s32 %v152, %v96
  %v185 = vadd.s32 %v153, %v96
  %v186 = vadd.s32 %v154, %v96
  %v187 = vadd.s32 %v155, %v96
  %v188 = vadd.s32 %v156, %v96
  %v189 = vadd.s32 %v157, %v96
  %v190 = vadd.s32 %v158, %v96
  %v191 = vadd.s32 %v159, %v96
  %v192 = vadd.s32 %v160, %v96
  %v193 = vadd.s32 %v161, %v96
  %v194 = vadd.s32 %v162, %v96
  %v195 = vadd.s32 %v163, %v96
  %v196 = vadd.s32 %v164, %v96
  %v197 = vadd.s32 %v165, %v96
  %s198 = smul.u32 %s77, 2654435769
  %v199 = vstv %s198
  %v200 = vxor.u32 %v166, %v199
  %v201 = vxor.u32 %v167, %v199
  %v202 = vxor.u32 %v168, %v199
  %v203 = vxor.u32 %v169, %v199
  %v204 = vxor.u32 %v170, %v199
  %v205 = vxor.u32 %v171, %v199
  %v206 = vxor.u32 %v172, %v199
  %v207 = vxor.u32 %v173, %v199
  %v208 = vxor.u32 %v174, %v199
  %v209 = vxor.u32 %v175, %v199
  %v210 = vxor.u32 %v176, %v199
  %v211 = vxor.u32 %v177, %v199
  %v212 = vxor.u32 %v178, %v199
  %v213 = vxor.u32 %v179, %v199
  %v214 = vxor.u32 %v180, %v199
  %v215 = vxor.u32 %v181, %v199
  %v216 = vxor.u32 %v182, %v199
  %v217 = vxor.u32 %v183, %v199
  %v218 = vxor.u32 %v184, %v199
  %v219 = vxor.u32 %v185, %v199
  %v220 = vxor.u32 %v186, %v199
  %v221 = vxor.u32 %v187, %v199
  %v222 = vxor.u32 %v188, %v199
  %v223 = vxor.u32 %v189, %v199
  %v224 = vxor.u32 %v190, %v199
  %v225 = vxor.u32 %v191, %v199
  %v226 = vxor.u32 %v192, %v199
  %v227 = vxor.u32 %v193, %v199
  %v228 = vxor.u32 %v194, %v199
  %v229 = vxor.u32 %v195, %v199
  %v230 = vxor.u32 %v196, %v199
  %v231 = vxor.u32 %v197, %v199
  %v232 = vshrl.u32 %v200, 16
  %v233 = vshrl.u32 %v201, 16
  %v234 = vshrl.u32 %v202, 16
  %v235 = vshrl.u32 %v203, 16
  %v236 = vshrl.u32 %v204, 16
  %v237 = vshrl.u32 %v205, 16
  %v238 = vshrl.u32 %v206, 16
  %v239 = vshrl.u32 %v207, 16
  %v240 = vshrl.u32 %v208, 16
  %v241 = vshrl.u32 %v209, 16
  %v242 = vshrl.u32 %v210, 16
  %v243 = vshrl.u32 %v211, 16
  %v244 = vshrl.u32 %v212, 16
  %v245 = vshrl.u32 %v213, 16
  %v246 = vshrl.u32 %v214, 16
  %v247 = vshrl.u32 %v215, 16
  %v248 = vshrl.u32 %v216, 16
  %v249 = vshrl.u32 %v217, 16
  %v250 = vshrl.u32 %v218, 16
  %v251 = vshrl.u32 %v219, 16
  %v252 = vshrl.u32 %v220, 16
  %v253 = vshrl.u32 %v221, 16
  %v254 = vshrl.u32 %v222, 16
  %v255 = vshrl.u32 %v223, 16
  %v256 = vshrl.u32 %v224, 16
  %v257 = vshrl.u32 %v225, 16
  %v258 = vshrl.u32 %v226, 16
  %v259 = vshrl.u32 %v227, 16
  %v260 = vshrl.u32 %v228, 16
  %v261 = vshrl.u32 %v229, 16
  %v262 = vshrl.u32 %v230, 16
  %v263 = vshrl.u32 %v231, 16
  %v264 = vxor.u32 %v200, %v232
  %v265 = vxor.u32 %v201, %v233
  %v266 = vxor.u32 %v202, %v234
  %v267 = vxor.u32 %v203, %v235
  %v268 = vxor.u32 %v204, %v236
  %v269 = vxor.u32 %v205, %v237
  %v270 = vxor.u32 %v206, %v238
  %v271 = vxor.u32 %v207, %v239
  %v272 = vxor.u32 %v208, %v240
  %v273 = vxor.u32 %v209, %v241
  %v274 = vxor.u32 %v210, %v242
  %v275 = vxor.u32 %v211, %v243
  %v276 = vxor.u32 %v212, %v244
  %v277 = vxor.u32 %v213, %v245
  %v278 = vxor.u32 %v214, %v246
  %v279 = vxor.u32 %v215, %v247
  %v280 = vxor.u32 %v216, %v248
  %v281 = vxor.u32 %v217, %v249
  %v282 = vxor.u32 %v218, %v250
  %v283 = vxor.u32 %v219, %v251
  %v284 = vxor.u32 %v220, %v252
  %v285 = vxor.u32 %v221, %v253
  %v286 = vxor.u32 %v222, %v254
  %v287 = vxor.u32 %v223, %v255
  %v288 = vxor.u32 %v224, %v256
  %v289 = vxor.u32 %v225, %v257
  %v290 = vxor.u32 %v226, %v258
  %v291 = vxor.u32 %v227, %v259
  %v292 = vxor.u32 %v228, %v260
  %v293 = vxor.u32 %v229, %v261
  %v294 = vxor.u32 %v230, %v262
  %v295 = vxor.u32 %v231, %v263
  %v296 = vmul.u32 %v264, 2146121005
  %v297 = vmul.u32 %v265, 2146121005
  %v298 = vmul.u32 %v266, 2146121005
  %v299 = vmul.u32 %v267, 2146121005
  %v300 = vmul.u32 %v268, 2146121005
  %v301 = vmul.u32 %v269, 2146121005
  %v302 = vmul.u32 %v270, 2146121005
  %v303 = vmul.u32 %v271, 2146121005
  %v304 = vmul.u32 %v272, 2146121005
  %v305 = vmul.u32 %v273, 2146121005
  %v306 = vmul.u32 %v274, 2146121005
  %v307 = vmul.u32 %v275, 2146121005
  %v308 = vmul.u32 %v276, 2146121005
  %v309 = vmul.u32 %v277, 2146121005
  %v310 = vmul.u32 %v278, 2146121005
  %v311 = vmul.u32 %v279, 2146121005
  %v312 = vmul.u32 %v280, 2146121005
  %v313 = vmul.u32 %v281, 2146121005
  %v314 = vmul.u32 %v282, 2146121005
  %v315 = vmul.u32 %v283, 2146121005
  %v316 = vmul.u32 %v284, 2146121005
  %v317 = vmul.u32 %v285, 2146121005
  %v318 = vmul.u32 %v286, 2146121005
  %v319 = vmul.u32 %v287, 2146121005
  %v320 = vmul.u32 %v288, 2146121005
  %v321 = vmul.u32 %v289, 2146121005
  %v322 = vmul.u32 %v290, 2146121005
  %v323 = vmul.u32 %v291, 2146121005
  %v324 = vmul.u32 %v292, 2146121005
  %v325 = vmul.u32 %v293, 2146121005
  %v326 = vmul.u32 %v294, 2146121005
  %v327 = vmul.u32 %v295, 2146121005
  %v328 = vshrl.u32 %v296, 15
  %v329 = vshrl.u32 %v297, 15
  %v330 = vshrl.u32 %v298, 15
  %v331 = vshrl.u32 %v299, 15
  %v332 = vshrl.u32 %v300, 15
  %v333 = vshrl.u32 %v301, 15
  %v334 = vshrl.u32 %v302, 15
  %v335 = vshrl.u32 %v303, 15
  %v336 = vshrl.u32 %v304, 15
  %v337 = vshrl.u32 %v305, 15
  %v338 = vshrl.u32 %v306, 15
  %v339 = vshrl.u32 %v307, 15
  %v340 = vshrl.u32 %v308, 15
  %v341 = vshrl.u32 %v309, 15
  %v342 = vshrl.u32 %v310, 15
  %v343 = vshrl.u32 %v311, 15
  %v344 = vshrl.u32 %v312, 15
  %v345 = vshrl.u32 %v313, 15
  %v346 = vshrl.u32 %v314, 15
  %v347 = vshrl.u32 %v315, 15
  %v348 = vshrl.u32 %v316, 15
  %v349 = vshrl.u32 %v317, 15
  %v350 = vshrl.u32 %v318, 15
  %v351 = vshrl.u32 %v319, 15
  %v352 = vshrl.u32 %v320, 15
  %v353 = vshrl.u32 %v321, 15
  %v354 = vshrl.u32 %v322, 15
  %v355 = vshrl.u32 %v323, 15
  %v356 = vshrl.u32 %v324, 15
  %v357 = vshrl.u32 %v325, 15
  %v358 = vshrl.u32 %v326, 15
  %v359 = vshrl.u32 %v327, 15
  %v360 = vxor.u32 %v296, %v328
  %v361 = vxor.u32 %v297, %v329
  %v362 = vxor.u32 %v298, %v330
  %v363 = vxor.u32 %v299, %v331
  %v364 = vxor.u32 %v300, %v332
  %v365 = vxor.u32 %v301, %v333
  %v366 = vxor.u32 %v302, %v334
  %v367 = vxor.u32 %v303, %v335
  %v368 = vxor.u32 %v304, %v336
  %v369 = vxor.u32 %v305, %v337
  %v370 = vxor.u32 %v306, %v338
  %v371 = vxor.u32 %v307, %v339
  %v372 = vxor.u32 %v308, %v340
  %v373 = vxor.u32 %v309, %v341
  %v374 = vxor.u32 %v310, %v342
  %v375 = vxor.u32 %v311, %v343
  %v376 = vxor.u32 %v312, %v344
  %v377 = vxor.u32 %v313, %v345
  %v378 = vxor.u32 %v314, %v346
  %v379 = vxor.u32 %v315, %v347
  %v380 = vxor.u32 %v316, %v348
  %v381 = vxor.u32 %v317, %v349
  %v382 = vxor.u32 %v318, %v350
  %v383 = vxor.u32 %v319, %v351
  %v384 = vxor.u32 %v320, %v352
  %v385 = vxor.u32 %v321, %v353
  %v386 = vxor.u32 %v322, %v354
  %v387 = vxor.u32 %v323, %v355
  %v388 = vxor.u32 %v324, %v356
  %v389 = vxor.u32 %v325, %v357
  %v390 = vxor.u32 %v326, %v358
  %v391 = vxor.u32 %v327, %v359
  %v392 = vmul.u32 %v360, 2221713035
  %v393 = vmul.u32 %v361, 2221713035
  %v394 = vmul.u32 %v362, 2221713035
  %v395 = vmul.u32 %v363, 2221713035
  %v396 = vmul.u32 %v364, 2221713035
  %v397 = vmul.u32 %v365, 2221713035
  %v398 = vmul.u32 %v366, 2221713035
  %v399 = vmul.u32 %v367, 2221713035
  %v400 = vmul.u32 %v368, 2221713035
  %v401 = vmul.u32 %v369, 2221713035
  %v402 = vmul.u32 %v370, 2221713035
  %v403 = vmul.u32 %v371, 2221713035
  %v404 = vmul.u32 %v372, 2221713035
  %v405 = vmul.u32 %v373, 2221713035
  %v406 = vmul.u32 %v374, 2221713035
  %v407 = vmul.u32 %v375, 2221713035
  %v408 = vmul.u32 %v376, 2221713035
  %v409 = vmul.u32 %v377, 2221713035
  %v410 = vmul.u32 %v378, 2221713035
  %v411 = vmul.u32 %v379, 2221713035
  %v412 = vmul.u32 %v380, 2221713035
  %v413 = vmul.u32 %v381, 2221713035
  %v414 = vmul.u32 %v382, 2221713035
  %v415 = vmul.u32 %v383, 2221713035
  %v416 = vmul.u32 %v384, 2221713035
  %v417 = vmul.u32 %v385, 2221713035
  %v418 = vmul.u32 %v386, 2221713035
  %v419 = vmul.u32 %v387, 2221713035
  %v420 = vmul.u32 %v388, 2221713035
  %v421 = vmul.u32 %v389, 2221713035
  %v422 = vmul.u32 %v390, 2221713035
  %v423 = vmul.u32 %v391, 2221713035
  %v424 = vshrl.u32 %v392, 16
  %v425 = vshrl.u32 %v393, 16
  %v426 = vshrl.u32 %v394, 16
  %v427 = vshrl.u32 %v395, 16
  %v428 = vshrl.u32 %v396, 16
  %v429 = vshrl.u32 %v397, 16
  %v430 = vshrl.u32 %v398, 16
  %v431 = vshrl.u32 %v399, 16
  %v432 = vshrl.u32 %v400, 16
  %v433 = vshrl.u32 %v401, 16
  %v434 = vshrl.u32 %v402, 16
  %v435 = vshrl.u32 %v403, 16
  %v436 = vshrl.u32 %v404, 16
  %v437 = vshrl.u32 %v405, 16
  %v438 = vshrl.u32 %v406, 16
  %v439 = vshrl.u32 %v407, 16
  %v440 = vshrl.u32 %v408, 16
  %v441 = vshrl.u32 %v409, 16
  %v442 = vshrl.u32 %v410, 16
  %v443 = vshrl.u32 %v411, 16
  %v444 = vshrl.u32 %v412, 16
  %v445 = vshrl.u32 %v413, 16
  %v446 = vshrl.u32 %v414, 16
  %v447 = vshrl.u32 %v415, 16
  %v448 = vshrl.u32 %v416, 16
  %v449 = vshrl.u32 %v417, 16
  %v450 = vshrl.u32 %v418, 16
  %v451 = vshrl.u32 %v419, 16
  %v452 = vshrl.u32 %v420, 16
  %v453 = vshrl.u32 %v421, 16
  %v454 = vshrl.u32 %v422, 16
  %v455 = vshrl.u32 %v423, 16
  %v456 = vxor.u32 %v392, %v424
  %v457 = vxor.u32 %v393, %v425
  %v458 = vxor.u32 %v394, %v426
  %v459 = vxor.u32 %v395, %v427
  %v460 = vxor.u32 %v396, %v428
  %v461 = vxor.u32 %v397, %v429
  %v462 = vxor.u32 %v398, %v430
  %v463 = vxor.u32 %v399, %v431
  %v464 = vxor.u32 %v400, %v432
  %v465 = vxor.u32 %v401, %v433
  %v466 = vxor.u32 %v402, %v434
  %v467 = vxor.u32 %v403, %v435
  %v468 = vxor.u32 %v404, %v436
  %v469 = vxor.u32 %v405, %v437
  %v470 = vxor.u32 %v406, %v438
  %v471 = vxor.u32 %v407, %v439
  %v472 = vxor.u32 %v408, %v440
  %v473 = vxor.u32 %v409, %v441
  %v474 = vxor.u32 %v410, %v442
  %v475 = vxor.u32 %v411, %v443
  %v476 = vxor.u32 %v412, %v444
  %v477 = vxor.u32 %v413, %v445
  %v478 = vxor.u32 %v414, %v446
  %v479 = vxor.u32 %v415, %v447
  %v480 = vxor.u32 %v416, %v448
  %v481 = vxor.u32 %v417, %v449
  %v482 = vxor.u32 %v418, %v450
  %v483 = vxor.u32 %v419, %v451
  %v484 = vxor.u32 %v420, %v452
  %v485 = vxor.u32 %v421, %v453
  %v486 = vxor.u32 %v422, %v454
  %v487 = vxor.u32 %v423, %v455
  %v488 = vand.u32 %v456, 16777215
  %v489 = vand.u32 %v457, 16777215
  %v490 = vand.u32 %v458, 16777215
  %v491 = vand.u32 %v459, 16777215
  %v492 = vand.u32 %v460, 16777215
  %v493 = vand.u32 %v461, 16777215
  %v494 = vand.u32 %v462, 16777215
  %v495 = vand.u32 %v463, 16777215
  %v496 = vand.u32 %v464, 16777215
  %v497 = vand.u32 %v465, 16777215
  %v498 = vand.u32 %v466, 16777215
  %v499 = vand.u32 %v467, 16777215
  %v500 = vand.u32 %v468, 16777215
  %v501 = vand.u32 %v469, 16777215
  %v502 = vand.u32 %v470, 16777215
  %v503 = vand.u32 %v471, 16777215
  %v504 = vand.u32 %v472, 16777215
  %v505 = vand.u32 %v473, 16777215
  %v506 = vand.u32 %v474, 16777215
  %v507 = vand.u32 %v475, 16777215
  %v508 = vand.u32 %v476, 16777215
  %v509 = vand.u32 %v477, 16777215
  %v510 = vand.u32 %v478, 16777215
  %v511 = vand.u32 %v479, 16777215
  %v512 = vand.u32 %v480, 16777215
  %v513 = vand.u32 %v481, 16777215
  %v514 = vand.u32 %v482, 16777215
  %v515 = vand.u32 %v483, 16777215
  %v516 = vand.u32 %v484, 16777215
  %v517 = vand.u32 %v485, 16777215
  %v518 = vand.u32 %v486, 16777215
  %v519 = vand.u32 %v487, 16777215
  %v520 = vcvt.s32.f32 %v488
  %v521 = vcvt.s32.f32 %v489
  %v522 = vcvt.s32.f32 %v490
  %v523 = vcvt.s32.f32 %v491
  %v524 = vcvt.s32.f32 %v492
  %v525 = vcvt.s32.f32 %v493
  %v526 = vcvt.s32.f32 %v494
  %v527 = vcvt.s32.f32 %v495
  %v528 = vcvt.s32.f32 %v496
  %v529 = vcvt.s32.f32 %v497
  %v530 = vcvt.s32.f32 %v498
  %v531 = vcvt.s32.f32 %v499
  %v532 = vcvt.s32.f32 %v500
  %v533 = vcvt.s32.f32 %v501
  %v534 = vcvt.s32.f32 %v502
  %v535 = vcvt.s32.f32 %v503
  %v536 = vcvt.s32.f32 %v504
  %v537 = vcvt.s32.f32 %v505
  %v538 = vcvt.s32.f32 %v506
  %v539 = vcvt.s32.f32 %v507
  %v540 = vcvt.s32.f32 %v508
  %v541 = vcvt.s32.f32 %v509
  %v542 = vcvt.s32.f32 %v510
  %v543 = vcvt.s32.f32 %v511
  %v544 = vcvt.s32.f32 %v512
  %v545 = vcvt.s32.f32 %v513
  %v546 = vcvt.s32.f32 %v514
  %v547 = vcvt.s32.f32 %v515
  %v548 = vcvt.s32.f32 %v516
  %v549 = vcvt.s32.f32 %v517
  %v550 = vcvt.s32.f32 %v518
  %v551 = vcvt.s32.f32 %v519
  %v552 = vmul.f32 %v520, 5.9604645e-08
  %v553 = vmul.f32 %v521, 5.9604645e-08
  %v554 = vmul.f32 %v522, 5.9604645e-08
  %v555 = vmul.f32 %v523, 5.9604645e-08
  %v556 = vmul.f32 %v524, 5.9604645e-08
  %v557 = vmul.f32 %v525, 5.9604645e-08
  %v558 = vmul.f32 %v526, 5.9604645e-08
  %v559 = vmul.f32 %v527, 5.9604645e-08
  %v560 = vmul.f32 %v528, 5.9604645e-08
  %v561 = vmul.f32 %v529, 5.9604645e-08
  %v562 = vmul.f32 %v530, 5.9604645e-08
  %v563 = vmul.f32 %v531, 5.9604645e-08
  %v564 = vmul.f32 %v532, 5.9604645e-08
  %v565 = vmul.f32 %v533, 5.9604645e-08
  %v566 = vmul.f32 %v534, 5.9604645e-08
  %v567 = vmul.f32 %v535, 5.9604645e-08
  %v568 = vmul.f32 %v536, 5.9604645e-08
  %v569 = vmul.f32 %v537, 5.9604645e-08
  %v570 = vmul.f32 %v538, 5.9604645e-08
  %v571 = vmul.f32 %v539, 5.9604645e-08
  %v572 = vmul.f32 %v540, 5.9604645e-08
  %v573 = vmul.f32 %v541, 5.9604645e-08
  %v574 = vmul.f32 %v542, 5.9604645e-08
  %v575 = vmul.f32 %v543, 5.9604645e-08
  %v576 = vmul.f32 %v544, 5.9604645e-08
  %v577 = vmul.f32 %v545, 5.9604645e-08
  %v578 = vmul.f32 %v546, 5.9604645e-08
  %v579 = vmul.f32 %v547, 5.9604645e-08
  %v580 = vmul.f32 %v548, 5.9604645e-08
  %v581 = vmul.f32 %v549, 5.9604645e-08
  %v582 = vmul.f32 %v550, 5.9604645e-08
  %v583 = vmul.f32 %v551, 5.9604645e-08
  %vm584 = vcmp.ge.f32.partialorder %v552, 0.1
  %vm585 = vcmp.ge.f32.partialorder %v553, 0.1
  %vm586 = vcmp.ge.f32.partialorder %v554, 0.1
  %vm587 = vcmp.ge.f32.partialorder %v555, 0.1
  %vm588 = vcmp.ge.f32.partialorder %v556, 0.1
  %vm589 = vcmp.ge.f32.partialorder %v557, 0.1
  %vm590 = vcmp.ge.f32.partialorder %v558, 0.1
  %vm591 = vcmp.ge.f32.partialorder %v559, 0.1
  %vm592 = vcmp.ge.f32.partialorder %v560, 0.1
  %vm593 = vcmp.ge.f32.partialorder %v561, 0.1
  %vm594 = vcmp.ge.f32.partialorder %v562, 0.1
  %vm595 = vcmp.ge.f32.partialorder %v563, 0.1
  %vm596 = vcmp.ge.f32.partialorder %v564, 0.1
  %vm597 = vcmp.ge.f32.partialorder %v565, 0.1
  %vm598 = vcmp.ge.f32.partialorder %v566, 0.1
  %vm599 = vcmp.ge.f32.partialorder %v567, 0.1
  %vm600 = vcmp.ge.f32.partialorder %v568, 0.1
  %vm601 = vcmp.ge.f32.partialorder %v569, 0.1
  %vm602 = vcmp.ge.f32.partialorder %v570, 0.1
  %vm603 = vcmp.ge.f32.partialorder %v571, 0.1
  %vm604 = vcmp.ge.f32.partialorder %v572, 0.1
  %vm605 = vcmp.ge.f32.partialorder %v573, 0.1
  %vm606 = vcmp.ge.f32.partialorder %v574, 0.1
  %vm607 = vcmp.ge.f32.partialorder %v575, 0.1
  %vm608 = vcmp.ge.f32.partialorder %v576, 0.1
  %vm609 = vcmp.ge.f32.partialorder %v577, 0.1
  %vm610 = vcmp.ge.f32.partialorder %v578, 0.1
  %vm611 = vcmp.ge.f32.partialorder %v579, 0.1
  %vm612 = vcmp.ge.f32.partialorder %v580, 0.1
  %vm613 = vcmp.ge.f32.partialorder %v581, 0.1
  %vm614 = vcmp.ge.f32.partialorder %v582, 0.1
  %vm615 = vcmp.ge.f32.partialorder %v583, 0.1
  %v616 = vsel %vm584, 1.1111112, 0.0
  %v617 = vsel %vm585, 1.1111112, 0.0
  %v618 = vsel %vm586, 1.1111112, 0.0
  %v619 = vsel %vm587, 1.1111112, 0.0
  %v620 = vsel %vm588, 1.1111112, 0.0
  %v621 = vsel %vm589, 1.1111112, 0.0
  %v622 = vsel %vm590, 1.1111112, 0.0
  %v623 = vsel %vm591, 1.1111112, 0.0
  %v624 = vsel %vm592, 1.1111112, 0.0
  %v625 = vsel %vm593, 1.1111112, 0.0
  %v626 = vsel %vm594, 1.1111112, 0.0
  %v627 = vsel %vm595, 1.1111112, 0.0
  %v628 = vsel %vm596, 1.1111112, 0.0
  %v629 = vsel %vm597, 1.1111112, 0.0
  %v630 = vsel %vm598, 1.1111112, 0.0
  %v631 = vsel %vm599, 1.1111112, 0.0
  %v632 = vsel %vm600, 1.1111112, 0.0
  %v633 = vsel %vm601, 1.1111112, 0.0
  %v634 = vsel %vm602, 1.1111112, 0.0
  %v635 = vsel %vm603, 1.1111112, 0.0
  %v636 = vsel %vm604, 1.1111112, 0.0
  %v637 = vsel %vm605, 1.1111112, 0.0
  %v638 = vsel %vm606, 1.1111112, 0.0
  %v639 = vsel %vm607, 1.1111112, 0.0
  %v640 = vsel %vm608, 1.1111112, 0.0
  %v641 = vsel %vm609, 1.1111112, 0.0
  %v642 = vsel %vm610, 1.1111112, 0.0
  %v643 = vsel %vm611, 1.1111112, 0.0
  %v644 = vsel %vm612, 1.1111112, 0.0
  %v645 = vsel %vm613, 1.1111112, 0.0
  %v646 = vsel %vm614, 1.1111112, 0.0
  %v647 = vsel %vm615, 1.1111112, 0.0
  %v648 = vmul.f32 %v13, %v616
  %v649 = vmul.f32 %v14, %v617
  %v650 = vmul.f32 %v15, %v618
  %v651 = vmul.f32 %v16, %v619
  %v652 = vmul.f32 %v17, %v620
  %v653 = vmul.f32 %v18, %v621
  %v654 = vmul.f32 %v19, %v622
  %v655 = vmul.f32 %v20, %v623
  %v656 = vmul.f32 %v21, %v624
  %v657 = vmul.f32 %v22, %v625
  %v658 = vmul.f32 %v23, %v626
  %v659 = vmul.f32 %v24, %v627
  %v660 = vmul.f32 %v25, %v628
  %v661 = vmul.f32 %v26, %v629
  %v662 = vmul.f32 %v27, %v630
  %v663 = vmul.f32 %v28, %v631
  %v664 = vmul.f32 %v29, %v632
  %v665 = vmul.f32 %v30, %v633
  %v666 = vmul.f32 %v31, %v634
  %v667 = vmul.f32 %v32, %v635
  %v668 = vmul.f32 %v33, %v636
  %v669 = vmul.f32 %v34, %v637
  %v670 = vmul.f32 %v35, %v638
  %v671 = vmul.f32 %v36, %v639
  %v672 = vmul.f32 %v37, %v640
  %v673 = vmul.f32 %v38, %v641
  %v674 = vmul.f32 %v39, %v642
  %v675 = vmul.f32 %v40, %v643
  %v676 = vmul.f32 %v41, %v644
  %v677 = vmul.f32 %v42, %v645
  %v678 = vmul.f32 %v43, %v646
  %v679 = vmul.f32 %v44, %v647
  %680 = vmatprep.subr.mxu0 0.0
  %681 = vmatpush1.msra.mxu0 %v60
  %682 = vmatprep.subr.mxu0 0.0
  %683 = vmatpush1.msra.mxu0 %v59
  %684 = vmatprep.subr.mxu0 0.0
  %685 = vmatpush1.msra.mxu0 %v58
  %686 = vmatprep.subr.mxu0 0.0
  %687 = vmatpush1.msra.mxu0 %v57
  %688 = vmatprep.subr.mxu0 0.0
  %689 = vmatpush1.msra.mxu0 %v56
  %690 = vmatprep.subr.mxu0 0.0
  %691 = vmatpush1.msra.mxu0 %v55
  %692 = vmatprep.subr.mxu0 0.0
  %693 = vmatpush1.msra.mxu0 %v54
  %694 = vmatprep.subr.mxu0 0.0
  %695 = vmatpush1.msra.mxu0 %v53
  %696 = vmatprep.subr.mxu0 0.0
  %697 = vmatpush1.msra.mxu0 %v52
  %698 = vmatprep.subr.mxu0 0.0
  %699 = vmatpush1.msra.mxu0 %v51
  %700 = vmatprep.subr.mxu0 0.0
  %701 = vmatpush1.msra.mxu0 %v50
  %702 = vmatprep.subr.mxu0 0.0
  %703 = vmatpush1.msra.mxu0 %v49
  %704 = vmatprep.subr.mxu0 0.0
  %705 = vmatpush1.msra.mxu0 %v48
  %706 = vmatprep.subr.mxu0 0.0
  %707 = vmatpush1.msra.mxu0 %v47
  %708 = vmatprep.subr.mxu0 0.0
  %709 = vmatpush1.msra.mxu0 %v46
  %710 = vmatprep.subr.mxu0 0.0
  %711 = vmatpush1.msra.mxu0 %v45
  %712 = vmatprep.subr.mxu0 0.0
  %713 = vmatpush2.msra.mxu0 0.0
  %714 = vmatprep.subr.mxu0 0.0
  %715 = vmatpush2.msra.mxu0 0.0
  %716 = vmatprep.subr.mxu0 0.0
  %717 = vmatpush2.msra.mxu0 0.0
  %718 = vmatprep.subr.mxu0 0.0
  %719 = vmatpush2.msra.mxu0 0.0
  %720 = vmatprep.subr.mxu0 0.0
  %721 = vmatpush2.msra.mxu0 0.0
  %722 = vmatprep.subr.mxu0 0.0
  %723 = vmatpush2.msra.mxu0 0.0
  %724 = vmatprep.subr.mxu0 0.0
  %725 = vmatpush2.msra.mxu0 0.0
  %726 = vmatprep.subr.mxu0 0.0
  %727 = vmatpush2.msra.mxu0 0.0
  %728 = vmatprep.subr.mxu0 0.0
  %729 = vmatpush2.msra.mxu0 0.0
  %730 = vmatprep.subr.mxu0 0.0
  %731 = vmatpush2.msra.mxu0 0.0
  %732 = vmatprep.subr.mxu0 0.0
  %733 = vmatpush2.msra.mxu0 0.0
  %734 = vmatprep.subr.mxu0 0.0
  %735 = vmatpush2.msra.mxu0 0.0
  %736 = vmatprep.subr.mxu0 0.0
  %737 = vmatpush2.msra.mxu0 0.0
  %738 = vmatprep.subr.mxu0 0.0
  %739 = vmatpush2.msra.mxu0 0.0
  %740 = vmatprep.subr.mxu0 0.0
  %741 = vmatpush2.msra.mxu0 0.0
  %742 = vmatprep.subr.mxu0 0.0
  %743 = vmatpush2.msra.mxu0 0.0
  %744 = vmatprep.mubr.f32.mxu0 0.0
  %745 = vmatmul.mubr.f32.gmra.mxu0 %v648
  %v746 = vpop.f32.mrf.mxu0
  %v747 = vadd.f32 0.0, %v746
  %v748 = vpop.f32.mrf.mxu0
  %749 = vmatprep.mubr.f32.mxu0 0.0
  %750 = vmatmul.mubr.f32.gmra.mxu0 %v649
  %v751 = vpop.f32.mrf.mxu0
  %v752 = vadd.f32 0.0, %v751
  %v753 = vpop.f32.mrf.mxu0
  %754 = vmatprep.mubr.f32.mxu0 0.0
  %755 = vmatmul.mubr.f32.gmra.mxu0 %v650
  %v756 = vpop.f32.mrf.mxu0
  %v757 = vadd.f32 0.0, %v756
  %v758 = vpop.f32.mrf.mxu0
  %759 = vmatprep.mubr.f32.mxu0 0.0
  %760 = vmatmul.mubr.f32.gmra.mxu0 %v651
  %v761 = vpop.f32.mrf.mxu0
  %v762 = vadd.f32 0.0, %v761
  %v763 = vpop.f32.mrf.mxu0
  %764 = vmatprep.mubr.f32.mxu0 0.0
  %765 = vmatmul.mubr.f32.gmra.mxu0 %v652
  %v766 = vpop.f32.mrf.mxu0
  %v767 = vadd.f32 0.0, %v766
  %v768 = vpop.f32.mrf.mxu0
  %769 = vmatprep.mubr.f32.mxu0 0.0
  %770 = vmatmul.mubr.f32.gmra.mxu0 %v653
  %v771 = vpop.f32.mrf.mxu0
  %v772 = vadd.f32 0.0, %v771
  %v773 = vpop.f32.mrf.mxu0
  %774 = vmatprep.mubr.f32.mxu0 0.0
  %775 = vmatmul.mubr.f32.gmra.mxu0 %v654
  %v776 = vpop.f32.mrf.mxu0
  %v777 = vadd.f32 0.0, %v776
  %v778 = vpop.f32.mrf.mxu0
  %779 = vmatprep.mubr.f32.mxu0 0.0
  %780 = vmatmul.mubr.f32.gmra.mxu0 %v655
  %v781 = vpop.f32.mrf.mxu0
  %v782 = vadd.f32 0.0, %v781
  %v783 = vpop.f32.mrf.mxu0
  %784 = vmatprep.mubr.f32.mxu0 0.0
  %785 = vmatmul.mubr.f32.gmra.mxu0 %v656
  %v786 = vpop.f32.mrf.mxu0
  %v787 = vadd.f32 0.0, %v786
  %v788 = vpop.f32.mrf.mxu0
  %789 = vmatprep.mubr.f32.mxu0 0.0
  %790 = vmatmul.mubr.f32.gmra.mxu0 %v657
  %v791 = vpop.f32.mrf.mxu0
  %v792 = vadd.f32 0.0, %v791
  %v793 = vpop.f32.mrf.mxu0
  %794 = vmatprep.mubr.f32.mxu0 0.0
  %795 = vmatmul.mubr.f32.gmra.mxu0 %v658
  %v796 = vpop.f32.mrf.mxu0
  %v797 = vadd.f32 0.0, %v796
  %v798 = vpop.f32.mrf.mxu0
  %799 = vmatprep.mubr.f32.mxu0 0.0
  %800 = vmatmul.mubr.f32.gmra.mxu0 %v659
  %v801 = vpop.f32.mrf.mxu0
  %v802 = vadd.f32 0.0, %v801
  %v803 = vpop.f32.mrf.mxu0
  %804 = vmatprep.mubr.f32.mxu0 0.0
  %805 = vmatmul.mubr.f32.gmra.mxu0 %v660
  %v806 = vpop.f32.mrf.mxu0
  %v807 = vadd.f32 0.0, %v806
  %v808 = vpop.f32.mrf.mxu0
  %809 = vmatprep.mubr.f32.mxu0 0.0
  %810 = vmatmul.mubr.f32.gmra.mxu0 %v661
  %v811 = vpop.f32.mrf.mxu0
  %v812 = vadd.f32 0.0, %v811
  %v813 = vpop.f32.mrf.mxu0
  %814 = vmatprep.mubr.f32.mxu0 0.0
  %815 = vmatmul.mubr.f32.gmra.mxu0 %v662
  %v816 = vpop.f32.mrf.mxu0
  %v817 = vadd.f32 0.0, %v816
  %v818 = vpop.f32.mrf.mxu0
  %819 = vmatprep.mubr.f32.mxu0 0.0
  %820 = vmatmul.mubr.f32.gmra.mxu0 %v663
  %v821 = vpop.f32.mrf.mxu0
  %v822 = vadd.f32 0.0, %v821
  %v823 = vpop.f32.mrf.mxu0
  %824 = vdwg.mxu0
  %825 = vmatprep.subr.mxu0 0.0
  %826 = vmatpush1.msra.mxu0 %v76
  %827 = vmatprep.subr.mxu0 0.0
  %828 = vmatpush1.msra.mxu0 %v75
  %829 = vmatprep.subr.mxu0 0.0
  %830 = vmatpush1.msra.mxu0 %v74
  %831 = vmatprep.subr.mxu0 0.0
  %832 = vmatpush1.msra.mxu0 %v73
  %833 = vmatprep.subr.mxu0 0.0
  %834 = vmatpush1.msra.mxu0 %v72
  %835 = vmatprep.subr.mxu0 0.0
  %836 = vmatpush1.msra.mxu0 %v71
  %837 = vmatprep.subr.mxu0 0.0
  %838 = vmatpush1.msra.mxu0 %v70
  %839 = vmatprep.subr.mxu0 0.0
  %840 = vmatpush1.msra.mxu0 %v69
  %841 = vmatprep.subr.mxu0 0.0
  %842 = vmatpush1.msra.mxu0 %v68
  %843 = vmatprep.subr.mxu0 0.0
  %844 = vmatpush1.msra.mxu0 %v67
  %845 = vmatprep.subr.mxu0 0.0
  %846 = vmatpush1.msra.mxu0 %v66
  %847 = vmatprep.subr.mxu0 0.0
  %848 = vmatpush1.msra.mxu0 %v65
  %849 = vmatprep.subr.mxu0 0.0
  %850 = vmatpush1.msra.mxu0 %v64
  %851 = vmatprep.subr.mxu0 0.0
  %852 = vmatpush1.msra.mxu0 %v63
  %853 = vmatprep.subr.mxu0 0.0
  %854 = vmatpush1.msra.mxu0 %v62
  %855 = vmatprep.subr.mxu0 0.0
  %856 = vmatpush1.msra.mxu0 %v61
  %857 = vmatprep.subr.mxu0 0.0
  %858 = vmatpush2.msra.mxu0 0.0
  %859 = vmatprep.subr.mxu0 0.0
  %860 = vmatpush2.msra.mxu0 0.0
  %861 = vmatprep.subr.mxu0 0.0
  %862 = vmatpush2.msra.mxu0 0.0
  %863 = vmatprep.subr.mxu0 0.0
  %864 = vmatpush2.msra.mxu0 0.0
  %865 = vmatprep.subr.mxu0 0.0
  %866 = vmatpush2.msra.mxu0 0.0
  %867 = vmatprep.subr.mxu0 0.0
  %868 = vmatpush2.msra.mxu0 0.0
  %869 = vmatprep.subr.mxu0 0.0
  %870 = vmatpush2.msra.mxu0 0.0
  %871 = vmatprep.subr.mxu0 0.0
  %872 = vmatpush2.msra.mxu0 0.0
  %873 = vmatprep.subr.mxu0 0.0
  %874 = vmatpush2.msra.mxu0 0.0
  %875 = vmatprep.subr.mxu0 0.0
  %876 = vmatpush2.msra.mxu0 0.0
  %877 = vmatprep.subr.mxu0 0.0
  %878 = vmatpush2.msra.mxu0 0.0
  %879 = vmatprep.subr.mxu0 0.0
  %880 = vmatpush2.msra.mxu0 0.0
  %881 = vmatprep.subr.mxu0 0.0
  %882 = vmatpush2.msra.mxu0 0.0
  %883 = vmatprep.subr.mxu0 0.0
  %884 = vmatpush2.msra.mxu0 0.0
  %885 = vmatprep.subr.mxu0 0.0
  %886 = vmatpush2.msra.mxu0 0.0
  %887 = vmatprep.subr.mxu0 0.0
  %888 = vmatpush2.msra.mxu0 0.0
  %889 = vmatprep.mubr.f32.mxu0 0.0
  %890 = vmatmul.mubr.f32.gmra.mxu0 %v664
  %v891 = vpop.f32.mrf.mxu0
  %v892 = vadd.f32 0.0, %v891
  %v893 = vpop.f32.mrf.mxu0
  %894 = vmatprep.mubr.f32.mxu0 0.0
  %895 = vmatmul.mubr.f32.gmra.mxu0 %v665
  %v896 = vpop.f32.mrf.mxu0
  %v897 = vadd.f32 0.0, %v896
  %v898 = vpop.f32.mrf.mxu0
  %899 = vmatprep.mubr.f32.mxu0 0.0
  %900 = vmatmul.mubr.f32.gmra.mxu0 %v666
  %v901 = vpop.f32.mrf.mxu0
  %v902 = vadd.f32 0.0, %v901
  %v903 = vpop.f32.mrf.mxu0
  %904 = vmatprep.mubr.f32.mxu0 0.0
  %905 = vmatmul.mubr.f32.gmra.mxu0 %v667
  %v906 = vpop.f32.mrf.mxu0
  %v907 = vadd.f32 0.0, %v906
  %v908 = vpop.f32.mrf.mxu0
  %909 = vmatprep.mubr.f32.mxu0 0.0
  %910 = vmatmul.mubr.f32.gmra.mxu0 %v668
  %v911 = vpop.f32.mrf.mxu0
  %v912 = vadd.f32 0.0, %v911
  %v913 = vpop.f32.mrf.mxu0
  %914 = vmatprep.mubr.f32.mxu0 0.0
  %915 = vmatmul.mubr.f32.gmra.mxu0 %v669
  %v916 = vpop.f32.mrf.mxu0
  %v917 = vadd.f32 0.0, %v916
  %v918 = vpop.f32.mrf.mxu0
  %919 = vmatprep.mubr.f32.mxu0 0.0
  %920 = vmatmul.mubr.f32.gmra.mxu0 %v670
  %v921 = vpop.f32.mrf.mxu0
  %v922 = vadd.f32 0.0, %v921
  %v923 = vpop.f32.mrf.mxu0
  %924 = vmatprep.mubr.f32.mxu0 0.0
  %925 = vmatmul.mubr.f32.gmra.mxu0 %v671
  %v926 = vpop.f32.mrf.mxu0
  %v927 = vadd.f32 0.0, %v926
  %v928 = vpop.f32.mrf.mxu0
  %929 = vmatprep.mubr.f32.mxu0 0.0
  %930 = vmatmul.mubr.f32.gmra.mxu0 %v672
  %v931 = vpop.f32.mrf.mxu0
  %v932 = vadd.f32 0.0, %v931
  %v933 = vpop.f32.mrf.mxu0
  %934 = vmatprep.mubr.f32.mxu0 0.0
  %935 = vmatmul.mubr.f32.gmra.mxu0 %v673
  %v936 = vpop.f32.mrf.mxu0
  %v937 = vadd.f32 0.0, %v936
  %v938 = vpop.f32.mrf.mxu0
  %939 = vmatprep.mubr.f32.mxu0 0.0
  %940 = vmatmul.mubr.f32.gmra.mxu0 %v674
  %v941 = vpop.f32.mrf.mxu0
  %v942 = vadd.f32 0.0, %v941
  %v943 = vpop.f32.mrf.mxu0
  %944 = vmatprep.mubr.f32.mxu0 0.0
  %945 = vmatmul.mubr.f32.gmra.mxu0 %v675
  %v946 = vpop.f32.mrf.mxu0
  %v947 = vadd.f32 0.0, %v946
  %v948 = vpop.f32.mrf.mxu0
  %949 = vmatprep.mubr.f32.mxu0 0.0
  %950 = vmatmul.mubr.f32.gmra.mxu0 %v676
  %v951 = vpop.f32.mrf.mxu0
  %v952 = vadd.f32 0.0, %v951
  %v953 = vpop.f32.mrf.mxu0
  %954 = vmatprep.mubr.f32.mxu0 0.0
  %955 = vmatmul.mubr.f32.gmra.mxu0 %v677
  %v956 = vpop.f32.mrf.mxu0
  %v957 = vadd.f32 0.0, %v956
  %v958 = vpop.f32.mrf.mxu0
  %959 = vmatprep.mubr.f32.mxu0 0.0
  %960 = vmatmul.mubr.f32.gmra.mxu0 %v678
  %v961 = vpop.f32.mrf.mxu0
  %v962 = vadd.f32 0.0, %v961
  %v963 = vpop.f32.mrf.mxu0
  %964 = vmatprep.mubr.f32.mxu0 0.0
  %965 = vmatmul.mubr.f32.gmra.mxu0 %v679
  %v966 = vpop.f32.mrf.mxu0
  %v967 = vadd.f32 0.0, %v966
  %v968 = vpop.f32.mrf.mxu0
  %969 = vdwg.mxu0
  %vm970 = vcmask 523264
  %971 = vst.msk [vmem:[%s3] sm:$0xff] %vm970, %v747
  %972 = vst.msk [vmem:[%s3 + $0x8] sm:$0xff] %vm970, %v752
  %973 = vst.msk [vmem:[%s3 + $0x10] sm:$0xff] %vm970, %v757
  %974 = vst.msk [vmem:[%s3 + $0x18] sm:$0xff] %vm970, %v762
  %975 = vst.msk [vmem:[%s3 + $0x20] sm:$0xff] %vm970, %v767
  %976 = vst.msk [vmem:[%s3 + $0x28] sm:$0xff] %vm970, %v772
  %977 = vst.msk [vmem:[%s3 + $0x30] sm:$0xff] %vm970, %v777
  %978 = vst.msk [vmem:[%s3 + $0x38] sm:$0xff] %vm970, %v782
  %979 = vst.msk [vmem:[%s3 + $0x40] sm:$0xff] %vm970, %v787
  %980 = vst.msk [vmem:[%s3 + $0x48] sm:$0xff] %vm970, %v792
  %981 = vst.msk [vmem:[%s3 + $0x50] sm:$0xff] %vm970, %v797
  %982 = vst.msk [vmem:[%s3 + $0x58] sm:$0xff] %vm970, %v802
  %983 = vst.msk [vmem:[%s3 + $0x60] sm:$0xff] %vm970, %v807
  %984 = vst.msk [vmem:[%s3 + $0x68] sm:$0xff] %vm970, %v812
  %985 = vst.msk [vmem:[%s3 + $0x70] sm:$0xff] %vm970, %v817
  %986 = vst.msk [vmem:[%s3 + $0x78] sm:$0xff] %vm970, %v822
  %987 = vst.msk [vmem:[%s3 + $0x80] sm:$0xff] %vm970, %v892
  %988 = vst.msk [vmem:[%s3 + $0x88] sm:$0xff] %vm970, %v897
  %989 = vst.msk [vmem:[%s3 + $0x90] sm:$0xff] %vm970, %v902
  %990 = vst.msk [vmem:[%s3 + $0x98] sm:$0xff] %vm970, %v907
  %991 = vst.msk [vmem:[%s3 + $0xa0] sm:$0xff] %vm970, %v912
  %992 = vst.msk [vmem:[%s3 + $0xa8] sm:$0xff] %vm970, %v917
  %993 = vst.msk [vmem:[%s3 + $0xb0] sm:$0xff] %vm970, %v922
  %994 = vst.msk [vmem:[%s3 + $0xb8] sm:$0xff] %vm970, %v927
  %995 = vst.msk [vmem:[%s3 + $0xc0] sm:$0xff] %vm970, %v932
  %996 = vst.msk [vmem:[%s3 + $0xc8] sm:$0xff] %vm970, %v937
  %997 = vst.msk [vmem:[%s3 + $0xd0] sm:$0xff] %vm970, %v942
  %998 = vst.msk [vmem:[%s3 + $0xd8] sm:$0xff] %vm970, %v947
  %999 = vst.msk [vmem:[%s3 + $0xe0] sm:$0xff] %vm970, %v952
  %1000 = vst.msk [vmem:[%s3 + $0xe8] sm:$0xff] %vm970, %v957
  %1001 = vst.msk [vmem:[%s3 + $0xf0] sm:$0xff] %vm970, %v962
  %1002 = vst.msk [vmem:[%s3 + $0xf8] sm:$0xff] %vm970, %v967
  // Predicated region
  $region10: #{tpu_custom_call.1} parent=0 // pred_check
    _
  $region11: #{tpu_custom_call.1} parent=0 // pred_check_branch
    %1004 = sbr.rel (0) target = $region13
  $region12: #{tpu_custom_call.1} parent=0 // pred_region
    _
  $region13: #{tpu_custom_call.1} parent=0 // pred_fallthru
    _
  // Predicated region
  $region14: #{tpu_custom_call.1} parent=0 // pred_check
    _
  $region15: #{tpu_custom_call.1} parent=0 // pred_check_branch
    %1006 = sbr.rel (0) target = $region17
  $region16: #{tpu_custom_call.1} parent=0 // pred_region
    _
  $region17: #{tpu_custom_call.1} parent=0 // pred_fallthru
    _

</llo_original>
